<compile_context>
chip_gen: v7x
topology: tpu7x:2x2x1
jax: 0.10.0
libtpu: 0.0.40
codegen_flags: <defaults>
</compile_context>

<pallas_src>
import jax
import jax.numpy as jnp
from jax.experimental import pallas as pl
from jax.experimental.pallas import tpu as pltpu

EPS = 1e-5  # PyTorch BatchNorm1d default

IN_F, H1, H2, H3 = 8, 128, 128, 32
LANES = 128

# Row layout (sublane offsets) of the packed (272, 128) parameter slab.
#   rows   0:8    w1  (8, 128)
#   rows   8:16   g1, be1, g2, be2, g3(pad), be3(pad), b4(pad), w4_row(pad)
#   rows  16:144  w2  (128, 128)
#   rows 144:272  w3  (128, 32) lane-padded to 128
_TOT_ROWS = 272


def _bn_relu(h, gamma, beta):
    """Training-mode BatchNorm1d (biased batch stats) + ReLU, single-pass variance."""
    mu = jnp.mean(h, axis=0, keepdims=True)
    ex2 = jnp.mean(h * h, axis=0, keepdims=True)
    var = jnp.maximum(ex2 - mu * mu, 0.0)
    h = (h - mu) * (jax.lax.rsqrt(var + EPS) * gamma) + beta
    return jnp.maximum(h, 0.0)


def salary_mlp_kernel(x_ref, p_ref, o_ref):
    x = x_ref[...]  # (B, 8)

    # Packed per-layer vectors (rows 8..15 of the slab).
    g1, be1 = p_ref[8:9, :], p_ref[9:10, :]
    g2, be2 = p_ref[10:11, :], p_ref[11:12, :]
    g3, be3 = p_ref[12:13, 0:H3], p_ref[13:14, 0:H3]
    b4 = p_ref[14:15, 0:1]
    w4_row = p_ref[15:16, 0:H3]

    # l1: (B,8) @ (8,128).  Bias b1 omitted: cancels under the BN mean subtraction.
    h = jnp.dot(x, p_ref[0:8, :], preferred_element_type=jnp.float32)
    h = _bn_relu(h, g1, be1)

    # l2: (B,128) @ (128,128).  b2 omitted.
    h = jnp.dot(h, p_ref[16:144, :], preferred_element_type=jnp.float32)
    h = _bn_relu(h, g2, be2)

    # l3: (B,128) @ (128,32).  b3 omitted.
    h = jnp.dot(h, p_ref[144:272, 0:H3], preferred_element_type=jnp.float32)
    h = _bn_relu(h, g3, be3)

    # l4: (B,32) @ (32,1) as VPU multiply + lane reduce (no wasted N=1 MXU pass).
    out = jnp.sum(h * w4_row, axis=-1, keepdims=True) + b4
    o_ref[...] = out.astype(o_ref.dtype)


def pack_params(params):
    """Full module params -> a single (272,128) f32 slab (drops dead biases)."""
    (w1, b1, g1, be1, w2, b2, g2, be2, w3, b3, g3, be3, w4, b4) = params
    del b1, b2, b3  # exactly cancelled by training-mode BN mean subtraction

    def pad_lanes(v):
        return jnp.pad(v, ((0, 0), (0, LANES - v.shape[1])))

    vecs = jnp.concatenate(
        [g1, be1, g2, be2,
         pad_lanes(g3), pad_lanes(be3), pad_lanes(b4), pad_lanes(w4.T)],
        axis=0,
    )  # (8, 128)

    packed = jnp.concatenate([w1, vecs, w2, pad_lanes(w3)], axis=0)
    assert packed.shape == (_TOT_ROWS, LANES)
    return packed.astype(jnp.float32)


@jax.jit
def salary_predictor_forward(x, packed_params):
    B = x.shape[0]
    vmem = pl.BlockSpec(memory_space=pltpu.MemorySpace.VMEM)
    return pl.pallas_call(
        salary_mlp_kernel,
        out_shape=jax.ShapeDtypeStruct((B, 1), jnp.float32),
        in_specs=[vmem, vmem],
        out_specs=vmem,
    )(x, packed_params)


# --------------------------------------------------------------------------- params


def _kaiming_uniform(key, shape, fan_in, gain):
    # torch.nn.init.kaiming_uniform_: U(-b, b), b = gain * sqrt(3 / fan_in)
    bound = gain * (3.0 / fan_in) ** 0.5
    return jax.random.uniform(key, shape, jnp.float32, minval=-bound, maxval=bound)


def init_params(key):
    gain_relu = 2.0 ** 0.5
    gain_lin = 1.0
    keys = jax.random.split(key, 8)

    # Linear weights stored as (in, out) for x @ W; PyTorch stores (out, in).
    w1 = _kaiming_uniform(keys[0], (IN_F, H1), fan_in=IN_F, gain=gain_relu)
    b1 = jax.random.uniform(keys[1], (1, H1), jnp.float32, -1.0, 1.0) * (1.0 / IN_F ** 0.5)
    w2 = _kaiming_uniform(keys[2], (H1, H2), fan_in=H1, gain=gain_relu)
    b2 = jax.random.uniform(keys[3], (1, H2), jnp.float32, -1.0, 1.0) * (1.0 / H1 ** 0.5)
    w3 = _kaiming_uniform(keys[4], (H2, H3), fan_in=H2, gain=gain_relu)
    b3 = jax.random.uniform(keys[5], (1, H3), jnp.float32, -1.0, 1.0) * (1.0 / H2 ** 0.5)
    w4 = _kaiming_uniform(keys[6], (H3, 1), fan_in=H3, gain=gain_lin)
    b4 = jax.random.uniform(keys[7], (1, 1), jnp.float32, -1.0, 1.0) * (1.0 / H3 ** 0.5)

    # BatchNorm1d affine params: gamma=1, beta=0 (PyTorch defaults).
    g1, be1 = jnp.ones((1, H1), jnp.float32), jnp.zeros((1, H1), jnp.float32)
    g2, be2 = jnp.ones((1, H2), jnp.float32), jnp.zeros((1, H2), jnp.float32)
    g3, be3 = jnp.ones((1, H3), jnp.float32), jnp.zeros((1, H3), jnp.float32)

    return (w1, b1, g1, be1, w2, b2, g2, be2, w3, b3, g3, be3, w4, b4)


def _reference_forward(x, params):
    """Pure-JAX f32 reference with the *full* module semantics (biases included)."""
    (w1, b1, g1, be1, w2, b2, g2, be2, w3, b3, g3, be3, w4, b4) = params

    def bn_relu(h, g, be):
        mu = jnp.mean(h, axis=0, keepdims=True)
        var = jnp.mean((h - mu) ** 2, axis=0, keepdims=True)
        return jnp.maximum((h - mu) / jnp.sqrt(var + EPS) * g + be, 0.0)

    h = bn_relu(x @ w1 + b1, g1, be1)
    h = bn_relu(h @ w2 + b2, g2, be2)
    h = bn_relu(h @ w3 + b3, g3, be3)
    return h @ w4 + b4


if __name__ == "__main__":
    key = jax.random.PRNGKey(0)
    pkey, xkey = jax.random.split(key)

    params = init_params(pkey)
    packed = pack_params(params)

    # Batch of 8 samples, 8 input features each (matches nn.Linear(8, 128)).
    x = jax.random.normal(xkey, (8, IN_F), dtype=jnp.float32)

    out = jax.block_until_ready(salary_predictor_forward(x, packed))
    ref = _reference_forward(x, params)

    assert out.shape == (8, 1)
    assert jnp.allclose(out, ref, atol=1e-3, rtol=1e-3), "kernel mismatch vs reference"

    print("KERNEL_OK")
</pallas_src>

<mosaic_0001>
module attributes {stable_mosaic.version = 11 : i64} {
  func.func @salary_mlp_kernel(%arg0: memref<8x8xf32, #tpu.memory_space<vmem>>, %arg1: memref<272x128xf32, #tpu.memory_space<vmem>>, %arg2: memref<8x1xf32, #tpu.memory_space<vmem>>) attributes {dimension_semantics = [], scalar_prefetch = 0 : i64, scratch_operands = 0 : i64, tpu.core_type = #tpu.core_type<tc>} {
    %c0 = arith.constant 0 : index
    %c0_0 = arith.constant 0 : index
    %0 = vector.load %arg0[%c0, %c0_0] : memref<8x8xf32, #tpu.memory_space<vmem>>, vector<8x8xf32>
    %c8 = arith.constant 8 : index
    %c0_1 = arith.constant 0 : index
    %1 = vector.load %arg1[%c8, %c0_1] : memref<272x128xf32, #tpu.memory_space<vmem>>, vector<1x128xf32>
    %c9 = arith.constant 9 : index
    %c0_2 = arith.constant 0 : index
    %2 = vector.load %arg1[%c9, %c0_2] : memref<272x128xf32, #tpu.memory_space<vmem>>, vector<1x128xf32>
    %c10 = arith.constant 10 : index
    %c0_3 = arith.constant 0 : index
    %3 = vector.load %arg1[%c10, %c0_3] : memref<272x128xf32, #tpu.memory_space<vmem>>, vector<1x128xf32>
    %c11 = arith.constant 11 : index
    %c0_4 = arith.constant 0 : index
    %4 = vector.load %arg1[%c11, %c0_4] : memref<272x128xf32, #tpu.memory_space<vmem>>, vector<1x128xf32>
    %c12 = arith.constant 12 : index
    %c0_5 = arith.constant 0 : index
    %5 = vector.load %arg1[%c12, %c0_5] : memref<272x128xf32, #tpu.memory_space<vmem>>, vector<1x32xf32>
    %c13 = arith.constant 13 : index
    %c0_6 = arith.constant 0 : index
    %6 = vector.load %arg1[%c13, %c0_6] : memref<272x128xf32, #tpu.memory_space<vmem>>, vector<1x32xf32>
    %c14 = arith.constant 14 : index
    %c0_7 = arith.constant 0 : index
    %7 = vector.load %arg1[%c14, %c0_7] : memref<272x128xf32, #tpu.memory_space<vmem>>, vector<1x1xf32>
    %c15 = arith.constant 15 : index
    %c0_8 = arith.constant 0 : index
    %8 = vector.load %arg1[%c15, %c0_8] : memref<272x128xf32, #tpu.memory_space<vmem>>, vector<1x32xf32>
    %c0_9 = arith.constant 0 : index
    %c0_10 = arith.constant 0 : index
    %9 = vector.load %arg1[%c0_9, %c0_10] : memref<272x128xf32, #tpu.memory_space<vmem>>, vector<8x128xf32>
    %cst = arith.constant dense<0.000000e+00> : vector<8x128xf32>
    %10 = tpu.matmul %0, %9, %cst {dimension_numbers = #tpu.dot_dimension_numbers<[1], [0], [0], [1], [0, 0, 1, 1], [], []>} : vector<8x8xf32>, vector<8x128xf32>, vector<8x128xf32> -> vector<8x128xf32>
    %cst_11 = arith.constant dense<0.000000e+00> : vector<128xf32>
    %11 = vector.multi_reduction <add>, %10, %cst_11 [0] : vector<8x128xf32> to vector<128xf32>
    %12 = vector.shape_cast %11 : vector<128xf32> to vector<1x128xf32>
    %cst_12 = arith.constant 8.000000e+00 : f32
    %13 = vector.broadcast %cst_12 : f32 to vector<1x128xf32>
    %14 = arith.divf %12, %13 : vector<1x128xf32>
    %15 = arith.mulf %10, %10 : vector<8x128xf32>
    %cst_13 = arith.constant dense<0.000000e+00> : vector<128xf32>
    %16 = vector.multi_reduction <add>, %15, %cst_13 [0] : vector<8x128xf32> to vector<128xf32>
    %17 = vector.shape_cast %16 : vector<128xf32> to vector<1x128xf32>
    %cst_14 = arith.constant 8.000000e+00 : f32
    %18 = vector.broadcast %cst_14 : f32 to vector<1x128xf32>
    %19 = arith.divf %17, %18 : vector<1x128xf32>
    %20 = arith.mulf %14, %14 : vector<1x128xf32>
    %21 = arith.subf %19, %20 : vector<1x128xf32>
    %cst_15 = arith.constant 0.000000e+00 : f32
    %22 = vector.broadcast %cst_15 : f32 to vector<1x128xf32>
    %23 = arith.maximumf %21, %22 : vector<1x128xf32>
    %24 = vector.broadcast %14 : vector<1x128xf32> to vector<8x128xf32>
    %25 = arith.subf %10, %24 : vector<8x128xf32>
    %cst_16 = arith.constant 9.99999974E-6 : f32
    %26 = vector.broadcast %cst_16 : f32 to vector<1x128xf32>
    %27 = arith.addf %23, %26 : vector<1x128xf32>
    %28 = math.rsqrt %27 : vector<1x128xf32>
    %29 = arith.mulf %28, %1 : vector<1x128xf32>
    %30 = vector.broadcast %29 : vector<1x128xf32> to vector<8x128xf32>
    %31 = arith.mulf %25, %30 : vector<8x128xf32>
    %32 = vector.broadcast %2 : vector<1x128xf32> to vector<8x128xf32>
    %33 = arith.addf %31, %32 : vector<8x128xf32>
    %cst_17 = arith.constant 0.000000e+00 : f32
    %34 = vector.broadcast %cst_17 : f32 to vector<8x128xf32>
    %35 = arith.maximumf %33, %34 : vector<8x128xf32>
    %c16 = arith.constant 16 : index
    %c0_18 = arith.constant 0 : index
    %36 = vector.load %arg1[%c16, %c0_18] : memref<272x128xf32, #tpu.memory_space<vmem>>, vector<128x128xf32>
    %cst_19 = arith.constant dense<0.000000e+00> : vector<8x128xf32>
    %37 = tpu.matmul %35, %36, %cst_19 {dimension_numbers = #tpu.dot_dimension_numbers<[1], [0], [0], [1], [0, 0, 1, 1], [], []>} : vector<8x128xf32>, vector<128x128xf32>, vector<8x128xf32> -> vector<8x128xf32>
    %cst_20 = arith.constant dense<0.000000e+00> : vector<128xf32>
    %38 = vector.multi_reduction <add>, %37, %cst_20 [0] : vector<8x128xf32> to vector<128xf32>
    %39 = vector.shape_cast %38 : vector<128xf32> to vector<1x128xf32>
    %cst_21 = arith.constant 8.000000e+00 : f32
    %40 = vector.broadcast %cst_21 : f32 to vector<1x128xf32>
    %41 = arith.divf %39, %40 : vector<1x128xf32>
    %42 = arith.mulf %37, %37 : vector<8x128xf32>
    %cst_22 = arith.constant dense<0.000000e+00> : vector<128xf32>
    %43 = vector.multi_reduction <add>, %42, %cst_22 [0] : vector<8x128xf32> to vector<128xf32>
    %44 = vector.shape_cast %43 : vector<128xf32> to vector<1x128xf32>
    %cst_23 = arith.constant 8.000000e+00 : f32
    %45 = vector.broadcast %cst_23 : f32 to vector<1x128xf32>
    %46 = arith.divf %44, %45 : vector<1x128xf32>
    %47 = arith.mulf %41, %41 : vector<1x128xf32>
    %48 = arith.subf %46, %47 : vector<1x128xf32>
    %cst_24 = arith.constant 0.000000e+00 : f32
    %49 = vector.broadcast %cst_24 : f32 to vector<1x128xf32>
    %50 = arith.maximumf %48, %49 : vector<1x128xf32>
    %51 = vector.broadcast %41 : vector<1x128xf32> to vector<8x128xf32>
    %52 = arith.subf %37, %51 : vector<8x128xf32>
    %cst_25 = arith.constant 9.99999974E-6 : f32
    %53 = vector.broadcast %cst_25 : f32 to vector<1x128xf32>
    %54 = arith.addf %50, %53 : vector<1x128xf32>
    %55 = math.rsqrt %54 : vector<1x128xf32>
    %56 = arith.mulf %55, %3 : vector<1x128xf32>
    %57 = vector.broadcast %56 : vector<1x128xf32> to vector<8x128xf32>
    %58 = arith.mulf %52, %57 : vector<8x128xf32>
    %59 = vector.broadcast %4 : vector<1x128xf32> to vector<8x128xf32>
    %60 = arith.addf %58, %59 : vector<8x128xf32>
    %cst_26 = arith.constant 0.000000e+00 : f32
    %61 = vector.broadcast %cst_26 : f32 to vector<8x128xf32>
    %62 = arith.maximumf %60, %61 : vector<8x128xf32>
    %c144 = arith.constant 144 : index
    %c0_27 = arith.constant 0 : index
    %63 = vector.load %arg1[%c144, %c0_27] : memref<272x128xf32, #tpu.memory_space<vmem>>, vector<128x32xf32>
    %cst_28 = arith.constant dense<0.000000e+00> : vector<8x32xf32>
    %64 = tpu.matmul %62, %63, %cst_28 {dimension_numbers = #tpu.dot_dimension_numbers<[1], [0], [0], [1], [0, 0, 1, 1], [], []>} : vector<8x128xf32>, vector<128x32xf32>, vector<8x32xf32> -> vector<8x32xf32>
    %cst_29 = arith.constant dense<0.000000e+00> : vector<32xf32>
    %65 = vector.multi_reduction <add>, %64, %cst_29 [0] : vector<8x32xf32> to vector<32xf32>
    %66 = vector.shape_cast %65 : vector<32xf32> to vector<1x32xf32>
    %cst_30 = arith.constant 8.000000e+00 : f32
    %67 = vector.broadcast %cst_30 : f32 to vector<1x32xf32>
    %68 = arith.divf %66, %67 : vector<1x32xf32>
    %69 = arith.mulf %64, %64 : vector<8x32xf32>
    %cst_31 = arith.constant dense<0.000000e+00> : vector<32xf32>
    %70 = vector.multi_reduction <add>, %69, %cst_31 [0] : vector<8x32xf32> to vector<32xf32>
    %71 = vector.shape_cast %70 : vector<32xf32> to vector<1x32xf32>
    %cst_32 = arith.constant 8.000000e+00 : f32
    %72 = vector.broadcast %cst_32 : f32 to vector<1x32xf32>
    %73 = arith.divf %71, %72 : vector<1x32xf32>
    %74 = arith.mulf %68, %68 : vector<1x32xf32>
    %75 = arith.subf %73, %74 : vector<1x32xf32>
    %cst_33 = arith.constant 0.000000e+00 : f32
    %76 = vector.broadcast %cst_33 : f32 to vector<1x32xf32>
    %77 = arith.maximumf %75, %76 : vector<1x32xf32>
    %78 = vector.broadcast %68 : vector<1x32xf32> to vector<8x32xf32>
    %79 = arith.subf %64, %78 : vector<8x32xf32>
    %cst_34 = arith.constant 9.99999974E-6 : f32
    %80 = vector.broadcast %cst_34 : f32 to vector<1x32xf32>
    %81 = arith.addf %77, %80 : vector<1x32xf32>
    %82 = math.rsqrt %81 : vector<1x32xf32>
    %83 = arith.mulf %82, %5 : vector<1x32xf32>
    %84 = vector.broadcast %83 : vector<1x32xf32> to vector<8x32xf32>
    %85 = arith.mulf %79, %84 : vector<8x32xf32>
    %86 = vector.broadcast %6 : vector<1x32xf32> to vector<8x32xf32>
    %87 = arith.addf %85, %86 : vector<8x32xf32>
    %cst_35 = arith.constant 0.000000e+00 : f32
    %88 = vector.broadcast %cst_35 : f32 to vector<8x32xf32>
    %89 = arith.maximumf %87, %88 : vector<8x32xf32>
    %90 = vector.broadcast %8 : vector<1x32xf32> to vector<8x32xf32>
    %91 = arith.mulf %89, %90 : vector<8x32xf32>
    %cst_36 = arith.constant dense<0.000000e+00> : vector<8xf32>
    %92 = vector.multi_reduction <add>, %91, %cst_36 [1] : vector<8x32xf32> to vector<8xf32>
    %93 = vector.shape_cast %92 : vector<8xf32> to vector<8x1xf32>
    %94 = vector.broadcast %7 : vector<1x1xf32> to vector<8x1xf32>
    %95 = arith.addf %93, %94 : vector<8x1xf32>
    %c0_37 = arith.constant 0 : index
    %c0_38 = arith.constant 0 : index
    %96 = vector.load %arg2[%c0_37, %c0_38] : memref<8x1xf32, #tpu.memory_space<vmem>>, vector<8x1xf32>
    tpu.vector_store %arg2[%c0_37, %c0_38], %95 {strides = array<i32>} : memref<8x1xf32, #tpu.memory_space<vmem>>, vector<8x1xf32>,
    return
  }
}

</mosaic_0001>

<llo_original>
// kernel: salary_predictor_forward.1
$region0: #{salary_predictor_forward.1}
  #allocation0 [shape = 'u32[]', space=smem, size = 0x4, offset = 0x4, fixed_abs, tag = 'smem constant byte address 0x4 - core index']
  #allocation1 [shape = 'u32[144,128]{1,0:T(1,128)}', space=vmem, size = 0x12000, scoped, tag = 'internal scratch']
  %s0 = inlined_call_operand.hbm [shape: f32[8,8], index: 0, kind: input, shape index: {}]
  %s1 = inlined_call_operand.hbm [shape: f32[272,128], index: 1, kind: input, shape index: {}]
  %s2 = inlined_call_operand.vmem [shape: f32[8,1], index: 2, kind: output, shape index: {}]
  %s3 = sld [smem:[#allocation0]]
  $region26: #{salary_predictor_forward.1} parent=0
    _
  %s5 = ssub.s32 1, %s3
  %s6 = scalar_select 0, %s5, %s3
  $region1: #{salary_predictor_forward.1} parent=0
    #allocation2 [shape = 'u8[4096]{0}', space=vmem, size = 0x1000, scoped, tag = 'input window, operand 0, single buffered']
    #allocation3 [shape = 's32[1]{0}', space=sflag, size = 0x4, scoped, tag = 'scoped memory for salary_predictor_forward.1']
    #allocation4 [shape = 'u8[139264]{0}', space=vmem, size = 0x22000, scoped, tag = 'input window, operand 1, single buffered']
    #allocation5 [shape = 's32[1]{0}', space=sflag, size = 0x4, scoped, tag = 'scoped memory for salary_predictor_forward.1']
    %7 = vsyncpa [#allocation3], 0
    %8 = vsyncpa [#allocation5], 0
    // Predicated region
    $region2: #{salary_predictor_forward.1} parent=1 // pred_check
      _
    $region3: #{salary_predictor_forward.1} parent=1 // pred_check_branch
      %10 = sbr.rel (0) target = $region5
    $region4: #{salary_predictor_forward.1} parent=1 // pred_region
      %s12 = ssub.s32 128, 128
      %13 = vsyncadd [#allocation3], %s12
      %s15 = sshll.u32 [#allocation2], 4
      %s16 = int_to_ptr.vmem [resolvable:$true] %s15
      %18 = dma.hbm_to_vmem [thread:$0]  %s0, 128, %s16, [#allocation3]
    $region5: #{salary_predictor_forward.1} parent=1 // pred_fallthru
      _
    // Predicated region
    $region6: #{salary_predictor_forward.1} parent=1 // pred_check
      _
    $region7: #{salary_predictor_forward.1} parent=1 // pred_check_branch
      %20 = sbr.rel (0) target = $region9
    $region8: #{salary_predictor_forward.1} parent=1 // pred_region
      %s22 = ssub.s32 4352, 4352
      %23 = vsyncadd [#allocation5], %s22
      %s24 = sshll.u32 [#allocation4], 4
      %s25 = int_to_ptr.vmem [resolvable:$true] %s24
      %30 = dma.hbm_to_vmem [thread:$0]  %s1, 4352, %s25, [#allocation5], 128, 128, 8
    $region9: #{salary_predictor_forward.1} parent=1 // pred_fallthru
      _
    // Predicated region
    $region10: #{salary_predictor_forward.1} parent=1 // pred_check
      _
    $region11: #{salary_predictor_forward.1} parent=1 // pred_check_branch
      %32 = sbr.rel (0) target = $region13
    $region12: #{salary_predictor_forward.1} parent=1 // pred_region
      %33 = dma.done [#allocation3], 128
    $region13: #{salary_predictor_forward.1} parent=1 // pred_fallthru
      _
    // Predicated region
    $region14: #{salary_predictor_forward.1} parent=1 // pred_check
      _
    $region15: #{salary_predictor_forward.1} parent=1 // pred_check_branch
      %35 = sbr.rel (0) target = $region17
    $region16: #{salary_predictor_forward.1} parent=1 // pred_region
      %36 = dma.done [#allocation5], 4352
    $region17: #{salary_predictor_forward.1} parent=1 // pred_fallthru
      _
    %v37 = vld [vmem:[#allocation2] sm:$0xff]
    %v38 = vld [vmem:[#allocation4 + $0x8] sm:$0x1]
    %v39 = vld [vmem:[#allocation4 + $0x9] sm:$0x1]
    %v40 = vld [vmem:[#allocation4 + $0xa] sm:$0x1]
    %v41 = vld [vmem:[#allocation4 + $0xb] sm:$0x1]
    %v42 = vld [vmem:[#allocation4 + $0xc] sm:$0x1]
    %v43 = vld [vmem:[#allocation4 + $0xd] sm:$0x1]
    %v44 = vld [vmem:[#allocation4 + $0xe] sm:$0x1]
    %v45 = vld [vmem:[#allocation4 + $0xf] sm:$0x1]
    %v46 = vld [vmem:[#allocation4] sm:$0xff]
    %vm47 = vcmask 64512
    %v49 = vsel %vm47, %v37, 0
    %51 = vmatprep.subr.mxu0 0.0
    %52 = vmatpush1.msra.mxu0 %v46
    %53 = vmatprep.subr.mxu0 0.0
    %54 = vmatpush1.msra.mxu0 0.0
    %55 = vmatprep.subr.mxu0 0.0
    %56 = vmatpush1.msra.mxu0 0.0
    %57 = vmatprep.subr.mxu0 0.0
    %58 = vmatpush1.msra.mxu0 0.0
    %59 = vmatprep.subr.mxu0 0.0
    %60 = vmatpush1.msra.mxu0 0.0
    %61 = vmatprep.subr.mxu0 0.0
    %62 = vmatpush1.msra.mxu0 0.0
    %63 = vmatprep.subr.mxu0 0.0
    %64 = vmatpush1.msra.mxu0 0.0
    %65 = vmatprep.subr.mxu0 0.0
    %66 = vmatpush1.msra.mxu0 0.0
    %67 = vmatprep.subr.mxu0 0.0
    %68 = vmatpush1.msra.mxu0 0.0
    %69 = vmatprep.subr.mxu0 0.0
    %70 = vmatpush1.msra.mxu0 0.0
    %71 = vmatprep.subr.mxu0 0.0
    %72 = vmatpush1.msra.mxu0 0.0
    %73 = vmatprep.subr.mxu0 0.0
    %74 = vmatpush1.msra.mxu0 0.0
    %75 = vmatprep.subr.mxu0 0.0
    %76 = vmatpush1.msra.mxu0 0.0
    %77 = vmatprep.subr.mxu0 0.0
    %78 = vmatpush1.msra.mxu0 0.0
    %79 = vmatprep.subr.mxu0 0.0
    %80 = vmatpush1.msra.mxu0 0.0
    %81 = vmatprep.subr.mxu0 0.0
    %82 = vmatpush1.msra.mxu0 0.0
    %83 = vmatprep.subr.mxu0 0.0
    %84 = vmatpush1.msra.mxu0 0.0
    %85 = vmatprep.subr.mxu0 0.0
    %86 = vmatpush1.msra.mxu0 0.0
    %87 = vmatprep.subr.mxu0 0.0
    %88 = vmatpush1.msra.mxu0 0.0
    %89 = vmatprep.subr.mxu0 0.0
    %90 = vmatpush1.msra.mxu0 0.0
    %91 = vmatprep.subr.mxu0 0.0
    %92 = vmatpush1.msra.mxu0 0.0
    %93 = vmatprep.subr.mxu0 0.0
    %94 = vmatpush1.msra.mxu0 0.0
    %95 = vmatprep.subr.mxu0 0.0
    %96 = vmatpush1.msra.mxu0 0.0
    %97 = vmatprep.subr.mxu0 0.0
    %98 = vmatpush1.msra.mxu0 0.0
    %99 = vmatprep.subr.mxu0 0.0
    %100 = vmatpush1.msra.mxu0 0.0
    %101 = vmatprep.subr.mxu0 0.0
    %102 = vmatpush1.msra.mxu0 0.0
    %103 = vmatprep.subr.mxu0 0.0
    %104 = vmatpush1.msra.mxu0 0.0
    %105 = vmatprep.subr.mxu0 0.0
    %106 = vmatpush1.msra.mxu0 0.0
    %107 = vmatprep.subr.mxu0 0.0
    %108 = vmatpush1.msra.mxu0 0.0
    %109 = vmatprep.subr.mxu0 0.0
    %110 = vmatpush1.msra.mxu0 0.0
    %111 = vmatprep.subr.mxu0 0.0
    %112 = vmatpush1.msra.mxu0 0.0
    %113 = vmatprep.subr.mxu0 0.0
    %114 = vmatpush1.msra.mxu0 0.0
    %115 = vmatprep.mubr.f32.mxu0 0.0
    %116 = vmatmul.mubr.f32.gmra.mrb[0].mxu0 %v49
    %v117 = vpop.f32.mrb[0].mxu0
    %v118 = vadd.f32 0.0, %v117
    %v119 = vpop.f32.mrb[0].mxu0
    %120 = vdwg.mxu0
    %v121 = vrot.slane %v118, 4
    %v122 = vadd.f32 %v118, %v121
    %v123 = vrot.slane %v122, 2
    %v124 = vadd.f32 %v122, %v123
    %v125 = vrot.slane %v124, 1
    %v126 = vadd.f32 %v124, %v125
    %v127 = vrcp.pop 8.0
    %v128 = vmul.f32 %v126, %v127
    %v129 = vmul.f32 %v118, %v118
    %v130 = vrot.slane %v129, 4
    %v131 = vadd.f32 %v129, %v130
    %v132 = vrot.slane %v131, 2
    %v133 = vadd.f32 %v131, %v132
    %v134 = vrot.slane %v133, 1
    %v135 = vadd.f32 %v133, %v134
    %v136 = vmul.f32 %v135, %v127
    %v137 = vmul.f32 %v128, %v128
    %v138 = vsub.f32 %v136, %v137
    %v139 = vmax.f32 %v138, 0.0
    %v140 = vsub.f32 %v118, %v128
    %v141 = vadd.f32 %v139, 1e-05
    %v142 = vrsqrt.pop %v141
    %v143 = vmul.f32 %v142, %v38
    %v144 = vlaneseq
    %v145 = vshrl.u32 %v144, 7
    %v146 = vsub.s32 0, %v145
    %v147 = vrot.slane %v143, %v146
    %v148 = vmul.f32 %v140, %v147
    %v149 = vlaneseq
    %v150 = vshrl.u32 %v149, 7
    %v151 = vsub.s32 0, %v150
    %v152 = vrot.slane %v39, %v151
    %v153 = vadd.f32 %v148, %v152
    %v154 = vmax.f32 %v153, 0.0
    %v155 = vld [vmem:[#allocation4 + $0x10] sm:$0xff]
    %v156 = vld [vmem:[#allocation4 + $0x18] sm:$0xff]
    %v157 = vld [vmem:[#allocation4 + $0x20] sm:$0xff]
    %v158 = vld [vmem:[#allocation4 + $0x28] sm:$0xff]
    %v159 = vld [vmem:[#allocation4 + $0x30] sm:$0xff]
    %v160 = vld [vmem:[#allocation4 + $0x38] sm:$0xff]
    %v161 = vld [vmem:[#allocation4 + $0x40] sm:$0xff]
    %v162 = vld [vmem:[#allocation4 + $0x48] sm:$0xff]
    %v163 = vld [vmem:[#allocation4 + $0x50] sm:$0xff]
    %v164 = vld [vmem:[#allocation4 + $0x58] sm:$0xff]
    %v165 = vld [vmem:[#allocation4 + $0x60] sm:$0xff]
    %v166 = vld [vmem:[#allocation4 + $0x68] sm:$0xff]
    %v167 = vld [vmem:[#allocation4 + $0x70] sm:$0xff]
    %v168 = vld [vmem:[#allocation4 + $0x78] sm:$0xff]
    %v169 = vld [vmem:[#allocation4 + $0x80] sm:$0xff]
    %v170 = vld [vmem:[#allocation4 + $0x88] sm:$0xff]
    %171 = vmatprep.subr.mxu0 0.0
    %172 = vmatpush1.msra.mxu0 %v155
    %173 = vmatprep.subr.mxu0 0.0
    %174 = vmatpush1.msra.mxu0 %v156
    %175 = vmatprep.subr.mxu0 0.0
    %176 = vmatpush1.msra.mxu0 %v157
    %177 = vmatprep.subr.mxu0 0.0
    %178 = vmatpush1.msra.mxu0 %v158
    %179 = vmatprep.subr.mxu0 0.0
    %180 = vmatpush1.msra.mxu0 %v159
    %181 = vmatprep.subr.mxu0 0.0
    %182 = vmatpush1.msra.mxu0 %v160
    %183 = vmatprep.subr.mxu0 0.0
    %184 = vmatpush1.msra.mxu0 %v161
    %185 = vmatprep.subr.mxu0 0.0
    %186 = vmatpush1.msra.mxu0 %v162
    %187 = vmatprep.subr.mxu0 0.0
    %188 = vmatpush1.msra.mxu0 %v163
    %189 = vmatprep.subr.mxu0 0.0
    %190 = vmatpush1.msra.mxu0 %v164
    %191 = vmatprep.subr.mxu0 0.0
    %192 = vmatpush1.msra.mxu0 %v165
    %193 = vmatprep.subr.mxu0 0.0
    %194 = vmatpush1.msra.mxu0 %v166
    %195 = vmatprep.subr.mxu0 0.0
    %196 = vmatpush1.msra.mxu0 %v167
    %197 = vmatprep.subr.mxu0 0.0
    %198 = vmatpush1.msra.mxu0 %v168
    %199 = vmatprep.subr.mxu0 0.0
    %200 = vmatpush1.msra.mxu0 %v169
    %201 = vmatprep.subr.mxu0 0.0
    %202 = vmatpush1.msra.mxu0 %v170
    %203 = vmatprep.subr.mxu0 0.0
    %204 = vmatpush1.msra.mxu0 0.0
    %205 = vmatprep.subr.mxu0 0.0
    %206 = vmatpush1.msra.mxu0 0.0
    %207 = vmatprep.subr.mxu0 0.0
    %208 = vmatpush1.msra.mxu0 0.0
    %209 = vmatprep.subr.mxu0 0.0
    %210 = vmatpush1.msra.mxu0 0.0
    %211 = vmatprep.subr.mxu0 0.0
    %212 = vmatpush1.msra.mxu0 0.0
    %213 = vmatprep.subr.mxu0 0.0
    %214 = vmatpush1.msra.mxu0 0.0
    %215 = vmatprep.subr.mxu0 0.0
    %216 = vmatpush1.msra.mxu0 0.0
    %217 = vmatprep.subr.mxu0 0.0
    %218 = vmatpush1.msra.mxu0 0.0
    %219 = vmatprep.subr.mxu0 0.0
    %220 = vmatpush1.msra.mxu0 0.0
    %221 = vmatprep.subr.mxu0 0.0
    %222 = vmatpush1.msra.mxu0 0.0
    %223 = vmatprep.subr.mxu0 0.0
    %224 = vmatpush1.msra.mxu0 0.0
    %225 = vmatprep.subr.mxu0 0.0
    %226 = vmatpush1.msra.mxu0 0.0
    %227 = vmatprep.subr.mxu0 0.0
    %228 = vmatpush1.msra.mxu0 0.0
    %229 = vmatprep.subr.mxu0 0.0
    %230 = vmatpush1.msra.mxu0 0.0
    %231 = vmatprep.subr.mxu0 0.0
    %232 = vmatpush1.msra.mxu0 0.0
    %233 = vmatprep.subr.mxu0 0.0
    %234 = vmatpush1.msra.mxu0 0.0
    %235 = vmatprep.mubr.f32.mxu0 0.0
    %236 = vmatmul.mubr.f32.gmra.mrb[0].mxu0 %v154
    %v237 = vpop.f32.mrb[0].mxu0
    %v238 = vadd.f32 0.0, %v237
    %v239 = vpop.f32.mrb[0].mxu0
    %240 = vdwg.mxu0
    %v241 = vrot.slane %v238, 4
    %v242 = vadd.f32 %v238, %v241
    %v243 = vrot.slane %v242, 2
    %v244 = vadd.f32 %v242, %v243
    %v245 = vrot.slane %v244, 1
    %v246 = vadd.f32 %v244, %v245
    %v247 = vmul.f32 %v246, %v127
    %v248 = vmul.f32 %v238, %v238
    %v249 = vrot.slane %v248, 4
    %v250 = vadd.f32 %v248, %v249
    %v251 = vrot.slane %v250, 2
    %v252 = vadd.f32 %v250, %v251
    %v253 = vrot.slane %v252, 1
    %v254 = vadd.f32 %v252, %v253
    %v255 = vmul.f32 %v254, %v127
    %v256 = vmul.f32 %v247, %v247
    %v257 = vsub.f32 %v255, %v256
    %v258 = vmax.f32 %v257, 0.0
    %v259 = vsub.f32 %v238, %v247
    %v260 = vadd.f32 %v258, 1e-05
    %v261 = vrsqrt.pop %v260
    %v262 = vmul.f32 %v261, %v40
    %v263 = vlaneseq
    %v264 = vshrl.u32 %v263, 7
    %v265 = vsub.s32 0, %v264
    %v266 = vrot.slane %v262, %v265
    %v267 = vmul.f32 %v259, %v266
    %v268 = vlaneseq
    %v269 = vshrl.u32 %v268, 7
    %v270 = vsub.s32 0, %v269
    %v271 = vrot.slane %v41, %v270
    %v272 = vadd.f32 %v267, %v271
    %v273 = vmax.f32 %v272, 0.0
    %v274 = vld [vmem:[#allocation4 + $0x90] sm:$0xff]
    %v275 = vld [vmem:[#allocation4 + $0x98] sm:$0xff]
    %v276 = vld [vmem:[#allocation4 + $0xa0] sm:$0xff]
    %v277 = vld [vmem:[#allocation4 + $0xa8] sm:$0xff]
    %v278 = vld [vmem:[#allocation4 + $0xb0] sm:$0xff]
    %v279 = vld [vmem:[#allocation4 + $0xb8] sm:$0xff]
    %v280 = vld [vmem:[#allocation4 + $0xc0] sm:$0xff]
    %v281 = vld [vmem:[#allocation4 + $0xc8] sm:$0xff]
    %v282 = vld [vmem:[#allocation4 + $0xd0] sm:$0xff]
    %v283 = vld [vmem:[#allocation4 + $0xd8] sm:$0xff]
    %v284 = vld [vmem:[#allocation4 + $0xe0] sm:$0xff]
    %v285 = vld [vmem:[#allocation4 + $0xe8] sm:$0xff]
    %v286 = vld [vmem:[#allocation4 + $0xf0] sm:$0xff]
    %v287 = vld [vmem:[#allocation4 + $0xf8] sm:$0xff]
    %v288 = vld [vmem:[#allocation4 + $0x100] sm:$0xff]
    %v289 = vld [vmem:[#allocation4 + $0x108] sm:$0xff]
    %290 = vmatprep.subr.mxu0 0.0
    %291 = vmatpush1.msra.mxu0 %v274
    %292 = vmatprep.subr.mxu0 0.0
    %293 = vmatpush1.msra.mxu0 %v275
    %294 = vmatprep.subr.mxu0 0.0
    %295 = vmatpush1.msra.mxu0 %v276
    %296 = vmatprep.subr.mxu0 0.0
    %297 = vmatpush1.msra.mxu0 %v277
    %298 = vmatprep.subr.mxu0 0.0
    %299 = vmatpush1.msra.mxu0 %v278
    %300 = vmatprep.subr.mxu0 0.0
    %301 = vmatpush1.msra.mxu0 %v279
    %302 = vmatprep.subr.mxu0 0.0
    %303 = vmatpush1.msra.mxu0 %v280
    %304 = vmatprep.subr.mxu0 0.0
    %305 = vmatpush1.msra.mxu0 %v281
    %306 = vmatprep.subr.mxu0 0.0
    %307 = vmatpush1.msra.mxu0 %v282
    %308 = vmatprep.subr.mxu0 0.0
    %309 = vmatpush1.msra.mxu0 %v283
    %310 = vmatprep.subr.mxu0 0.0
    %311 = vmatpush1.msra.mxu0 %v284
    %312 = vmatprep.subr.mxu0 0.0
    %313 = vmatpush1.msra.mxu0 %v285
    %314 = vmatprep.subr.mxu0 0.0
    %315 = vmatpush1.msra.mxu0 %v286
    %316 = vmatprep.subr.mxu0 0.0
    %317 = vmatpush1.msra.mxu0 %v287
    %318 = vmatprep.subr.mxu0 0.0
    %319 = vmatpush1.msra.mxu0 %v288
    %320 = vmatprep.subr.mxu0 0.0
    %321 = vmatpush1.msra.mxu0 %v289
    %322 = vmatprep.subr.mxu0 0.0
    %323 = vmatpush1.msra.mxu0 0.0
    %324 = vmatprep.subr.mxu0 0.0
    %325 = vmatpush1.msra.mxu0 0.0
    %326 = vmatprep.subr.mxu0 0.0
    %327 = vmatpush1.msra.mxu0 0.0
    %328 = vmatprep.subr.mxu0 0.0
    %329 = vmatpush1.msra.mxu0 0.0
    %330 = vmatprep.subr.mxu0 0.0
    %331 = vmatpush1.msra.mxu0 0.0
    %332 = vmatprep.subr.mxu0 0.0
    %333 = vmatpush1.msra.mxu0 0.0
    %334 = vmatprep.subr.mxu0 0.0
    %335 = vmatpush1.msra.mxu0 0.0
    %336 = vmatprep.subr.mxu0 0.0
    %337 = vmatpush1.msra.mxu0 0.0
    %338 = vmatprep.subr.mxu0 0.0
    %339 = vmatpush1.msra.mxu0 0.0
    %340 = vmatprep.subr.mxu0 0.0
    %341 = vmatpush1.msra.mxu0 0.0
    %342 = vmatprep.subr.mxu0 0.0
    %343 = vmatpush1.msra.mxu0 0.0
    %344 = vmatprep.subr.mxu0 0.0
    %345 = vmatpush1.msra.mxu0 0.0
    %346 = vmatprep.subr.mxu0 0.0
    %347 = vmatpush1.msra.mxu0 0.0
    %348 = vmatprep.subr.mxu0 0.0
    %349 = vmatpush1.msra.mxu0 0.0
    %350 = vmatprep.subr.mxu0 0.0
    %351 = vmatpush1.msra.mxu0 0.0
    %352 = vmatprep.subr.mxu0 0.0
    %353 = vmatpush1.msra.mxu0 0.0
    %354 = vmatprep.mubr.f32.mxu0 0.0
    %355 = vmatmul.mubr.f32.gmra.mrb[0].mxu0 %v273
    %v356 = vpop.f32.mrb[0].mxu0
    %v357 = vadd.f32 0.0, %v356
    %v358 = vpop.f32.mrb[0].mxu0
    %359 = vdwg.mxu0
    %vm360 = vcmask 261120
    %v361 = vsel %vm360, %v357, 0.0
    %v362 = vrot.slane %v361, 4
    %v363 = vadd.f32 %v361, %v362
    %v364 = vrot.slane %v363, 2
    %v365 = vadd.f32 %v363, %v364
    %v366 = vrot.slane %v365, 1
    %v367 = vadd.f32 %v365, %v366
    %v368 = vmul.f32 %v367, %v127
    %v369 = vmul.f32 %v357, %v357
    %v370 = vsel %vm360, %v369, 0.0
    %v371 = vrot.slane %v370, 4
    %v372 = vadd.f32 %v370, %v371
    %v373 = vrot.slane %v372, 2
    %v374 = vadd.f32 %v372, %v373
    %v375 = vrot.slane %v374, 1
    %v376 = vadd.f32 %v374, %v375
    %v377 = vmul.f32 %v376, %v127
    %v378 = vmul.f32 %v368, %v368
    %v379 = vsub.f32 %v377, %v378
    %v380 = vmax.f32 %v379, 0.0
    %v381 = vsub.f32 %v357, %v368
    %v382 = vadd.f32 %v380, 1e-05
    %v383 = vrsqrt.pop %v382
    %v384 = vmul.f32 %v383, %v42
    %v385 = vlaneseq
    %v386 = vshrl.u32 %v385, 7
    %v387 = vsub.s32 0, %v386
    %v388 = vrot.slane %v384, %v387
    %v389 = vmul.f32 %v381, %v388
    %v390 = vlaneseq
    %v391 = vshrl.u32 %v390, 7
    %v392 = vsub.s32 0, %v391
    %v393 = vrot.slane %v43, %v392
    %v394 = vadd.f32 %v389, %v393
    %v395 = vmax.f32 %v394, 0.0
    %v396 = vlaneseq
    %v397 = vshrl.u32 %v396, 7
    %v398 = vsub.s32 0, %v397
    %v399 = vrot.slane %v45, %v398
    %v400 = vmul.f32 %v395, %v399
    %v401 = vsel %vm360, %v400, 0.0
    %402 = vadd.xlane.f32.xlu0 %v401
    %v403 = vpop.xlane.xlu0 %402
    %v404 = vlaneseq
    %v405 = vshrl.u32 %v404, 7
    %v406 = vsub.s32 0, %v405
    %v407 = vrot.slane %v44, %v406
    %v408 = vadd.f32 %v403, %v407
    %vm409 = vcmask 7168
    %410 = vst.msk [vmem:[%s2] sm:$0xff] %vm409, %v408
    // Predicated region
    $region18: #{salary_predictor_forward.1} parent=1 // pred_check
      _
    $region19: #{salary_predictor_forward.1} parent=1 // pred_check_branch
      %412 = sbr.rel (0) target = $region21
    $region20: #{salary_predictor_forward.1} parent=1 // pred_region
      _
    $region21: #{salary_predictor_forward.1} parent=1 // pred_fallthru
      _
    // Predicated region
    $region22: #{salary_predictor_forward.1} parent=1 // pred_check
      _
    $region23: #{salary_predictor_forward.1} parent=1 // pred_check_branch
      %414 = sbr.rel (0) target = $region25
    $region24: #{salary_predictor_forward.1} parent=1 // pred_region
      _
    $region25: #{salary_predictor_forward.1} parent=1 // pred_fallthru
      _
    %415 = vsyncpa [#allocation3], 1
    %416 = vsyncpa [#allocation5], 1

</llo_original>
